<compile_context>
chip_gen: v7x
topology: tpu7x:2x2x1
jax: 0.10.0
libtpu: 0.0.40
codegen_flags: <defaults>
</compile_context>

<pallas_src>
import functools

import jax
import jax.numpy as jnp
from jax.experimental import pallas as pl
from jax.experimental.pallas import tpu as pltpu


# ------------------------------- kernels ----------------------------------- #

def _store_output(o_ref, x, y, *, cin, cout, concat, split_store):
    """act(linear(...)) plus (optionally) the fused skip-concat.

    A single full-tile store keeps the output lane-dense (unmasked vst); the
    column-sliced split store is used only when both column ranges are
    128-lane aligned.
    """
    if not concat:
        o_ref[...] = y.astype(o_ref.dtype)
        return
    if split_store:
        o_ref[:, :cin] = x.astype(o_ref.dtype)
        o_ref[:, cin:cin + cout] = y.astype(o_ref.dtype)
    else:
        o_ref[...] = jnp.concatenate(
            [x.astype(o_ref.dtype), y.astype(o_ref.dtype)], axis=-1)


def _be_kernel(x_ref, r_ref, w_ref, s_ref, o_ref, *,
               cin, cout, tiles_per_member, activation, concat, split_store):
    """BatchEnsemble path: ((x * r) @ W) * s -> act -> fused concat.

    Fast path (tiles_per_member != None): r_ref/s_ref are the tiny resident
    [be_size, C] tables; the ensemble member row for this batch tile is
    selected with a dynamic row slice and broadcast in-register.
    Materialized path (tiles_per_member is None): r_ref/s_ref are pre-replicated
    (TM, C) batch tiles (used when rep is too small for a healthy fast-path TM).
    """
    x = x_ref[...]
    if tiles_per_member is not None:
        m = pl.program_id(0) // tiles_per_member           # ensemble member id
        r = r_ref[pl.ds(m, 1), :]                          # (1, Cin)
        s = s_ref[pl.ds(m, 1), :]                          # (1, Cout)
    else:
        r = r_ref[...]                                     # (TM, Cin)
        s = s_ref[...]                                     # (TM, Cout)

    # w_ref is pre-transposed to [Cin, Cout] in the wrapper -> plain (1,0)
    # contraction, no per-iteration relayout of the weight.
    y = jnp.dot(x * r, w_ref[...], preferred_element_type=jnp.float32) * s
    if activation == 'tanh':
        y = jnp.tanh(y)
    _store_output(o_ref, x, y, cin=cin, cout=cout,
                  concat=concat, split_store=split_store)


def _plain_kernel(*refs, cin, cout, has_bias, activation, concat, split_store):
    """Plain nn.Linear path (be_size=None): x @ W (+ b) -> act -> fused concat."""
    if has_bias:
        x_ref, w_ref, b_ref, o_ref = refs
    else:
        x_ref, w_ref, o_ref = refs

    x = x_ref[...]
    y = jnp.dot(x, w_ref[...], preferred_element_type=jnp.float32)
    if has_bias:
        y = y + b_ref[...]                                 # (1, Cout), broadcast
    if activation == 'tanh':
        y = jnp.tanh(y)
    _store_output(o_ref, x, y, cin=cin, cout=cout,
                  concat=concat, split_store=split_store)


# ------------------------------- wrapper ------------------------------------ #

_TM_CANDIDATES = (2048, 1024, 512, 256, 128, 64, 32, 16, 8)
_MIN_FAST_TM = 128      # below this, the resident-table fast path underfills the chip


def _vmem_budget_bytes():
    """Generation-aware (budget, scoped-limit).

    v5e/v6e have 128 MiB physical VMEM -> 64 MiB budget / 96 MiB limit.
    v7x has only 64 MiB -> conservative 24 / 32 MiB (also the safe default when
    the hardware query is unavailable).
    """
    try:
        cap = pltpu.get_tpu_info().vmem_capacity_bytes
    except Exception:
        cap = None
    if cap is not None and cap >= 100 * 1024 * 1024:
        return 64 * 1024 * 1024, 96 * 1024 * 1024
    return 24 * 1024 * 1024, 32 * 1024 * 1024


def _pick_tm(batch, bytes_per_row, resident_bytes, budget, rep=None):
    """Largest batch tile TM that (a) divides B, (b) keeps a tile inside a single
    ensemble member when `rep` is given, and (c) fits the VMEM budget together
    with the (double-buffered) resident operands."""
    for t in _TM_CANDIDATES:
        if batch % t:
            continue
        if rep is not None and rep % t:
            continue
        if resident_bytes + t * bytes_per_row <= budget:
            return t
    return None


def linear_block_forward(x, weight, bias=None, ri=None, si=None, be_size=None,
                         activation='tanh', skip_connection='concat'):
    """Forward pass of LinearBlock.

    x:      [B, Cin] activations
    weight: [Cout, Cin]  nn.Linear weight (PyTorch layout; transposed once here)
    bias:   [Cout] or None (only meaningful when be_size is None)
    ri:     [be_size, Cin]  BatchEnsemble input scales
    si:     [be_size, Cout] BatchEnsemble output scales
    """
    B, Cin = x.shape
    Cout = weight.shape[0]
    concat = (skip_connection == 'concat')
    out_cols = Cin + Cout if concat else Cout
    itemsize = jnp.dtype(x.dtype).itemsize
    out_shape = jax.ShapeDtypeStruct((B, out_cols), x.dtype)
    # Split (column-sliced) stores only when both column ranges are 128-lane
    # aligned; otherwise build the concat in vregs and do one dense store.
    split_store = concat and (Cin % 128 == 0) and (Cout % 128 == 0)

    budget, vmem_limit = _vmem_budget_bytes()

    # One-time, wrapper-side transpose to the MXU-native [Cin, Cout] layout
    # (amortized over all batch tiles; hoisted/fused by XLA under jit).
    wt = weight.T

    # Resident operands are double-buffered by the default pipeline -> count 2x.
    w_res = 2 * Cin * Cout * itemsize
    # Per-row working set: double-buffered x + output tiles plus f32
    # matmul/activation/concat intermediates.
    row_bytes = 2 * (Cin + out_cols) * itemsize + 4 * (Cin + Cout + out_cols)

    if be_size is not None:
        assert B % be_size == 0, "batch size must be divisible by be_size"
        rep = B // be_size
        rs_res = 2 * be_size * (Cin + Cout) * itemsize
        tm_fast = _pick_tm(B, row_bytes, w_res + rs_res, budget, rep=rep)
        row_mat = row_bytes + 2 * (Cin + Cout) * 4          # + R/S batch tiles
        tm_mat = _pick_tm(B, row_mat, w_res, budget)
        use_fast = tm_fast is not None and (
            tm_fast >= _MIN_FAST_TM or tm_mat is None or tm_fast >= tm_mat)

        if use_fast:
            # Resident-table fast path: ri/si stay tiny in VMEM, no [B, C]
            # replication is ever written to HBM.
            tm = tm_fast
            kernel = functools.partial(
                _be_kernel, cin=Cin, cout=Cout, tiles_per_member=rep // tm,
                activation=activation, concat=concat, split_store=split_store)
            in_specs = [
                pl.BlockSpec((tm, Cin), lambda i: (i, 0)),
                pl.BlockSpec((be_size, Cin), lambda i: (0, 0)),    # resident table
                pl.BlockSpec((Cin, Cout), lambda i: (0, 0)),       # resident W
                pl.BlockSpec((be_size, Cout), lambda i: (0, 0)),   # resident table
            ]
            operands = (x, ri, wt, si)
        else:
            # Small rep (or awkward shapes): materialize R/S once in the wrapper
            # but keep a *tiled*, pipelined grid (no monolithic fallback).
            tm = tm_mat if tm_mat is not None else B   # last resort for odd B
            R = jnp.repeat(ri, rep, axis=0)            # repeat_interleave, dim=0
            S = jnp.repeat(si, rep, axis=0)
            kernel = functools.partial(
                _be_kernel, cin=Cin, cout=Cout, tiles_per_member=None,
                activation=activation, concat=concat, split_store=split_store)
            in_specs = [
                pl.BlockSpec((tm, Cin), lambda i: (i, 0)),
                pl.BlockSpec((tm, Cin), lambda i: (i, 0)),
                pl.BlockSpec((Cin, Cout), lambda i: (0, 0)),       # resident W
                pl.BlockSpec((tm, Cout), lambda i: (i, 0)),
            ]
            operands = (x, R, wt, S)
    else:
        has_bias = bias is not None
        resident = w_res + (2 * Cout * itemsize if has_bias else 0)
        tm = _pick_tm(B, row_bytes, resident, budget) or B  # tiled whenever possible
        kernel = functools.partial(
            _plain_kernel, cin=Cin, cout=Cout, has_bias=has_bias,
            activation=activation, concat=concat, split_store=split_store)
        in_specs = [
            pl.BlockSpec((tm, Cin), lambda i: (i, 0)),
            pl.BlockSpec((Cin, Cout), lambda i: (0, 0)),           # resident W
        ]
        operands = (x, wt)
        if has_bias:
            in_specs.append(pl.BlockSpec((1, Cout), lambda i: (0, 0)))
            operands = operands + (jnp.reshape(bias, (1, Cout)),)

    grid = (B // tm,)
    out = pl.pallas_call(
        kernel,
        out_shape=out_shape,
        grid_spec=pltpu.PrefetchScalarGridSpec(
            num_scalar_prefetch=0,
            grid=grid,
            in_specs=in_specs,
            out_specs=pl.BlockSpec((tm, out_cols), lambda i: (i, 0)),
        ),
        compiler_params=pltpu.CompilerParams(
            # Batch tiles are fully independent.
            # TODO(synk): try pltpu.CORE_PARALLEL to shard tiles over v7x's 2 TCs.
            dimension_semantics=("parallel",),
            vmem_limit_bytes=vmem_limit),
    )(*operands)

    # TODO(synk): training-mode dropout (random mask + 1/(1-p) scale) is not
    # implemented; eval-mode dropout is the identity, which is what this computes.
    return out


# --------------------------------- demo ------------------------------------- #

if __name__ == "__main__":
    key = jax.random.PRNGKey(0)
    kx, kw, kb, kr, ks, kx2, kr2, ks2 = jax.random.split(key, 8)

    # LinearBlock(in_channels=32, out_channels=32, activation='tanh',
    #             skip_connection='concat', be_size=2) at small shapes.
    B, Cin, Cout, be_size = 16, 32, 32, 2

    x = jax.random.normal(kx, (B, Cin), dtype=jnp.float32)
    weight = jax.random.normal(kw, (Cout, Cin), dtype=jnp.float32) * 0.1   # nn.Linear weight
    bias = jax.random.normal(kb, (Cout,), dtype=jnp.float32) * 0.1
    ri = jax.random.normal(kr, (be_size, Cin), dtype=jnp.float32)          # BatchEnsemble r_i
    si = jax.random.normal(ks, (be_size, Cout), dtype=jnp.float32)         # BatchEnsemble s_i

    # --- BatchEnsemble + tanh + concat (module's main configuration) ---
    out_be = jax.block_until_ready(
        linear_block_forward(x, weight, ri=ri, si=si, be_size=be_size,
                             activation='tanh', skip_connection='concat'))
    R = jnp.repeat(ri, B // be_size, axis=0)
    S = jnp.repeat(si, B // be_size, axis=0)
    ref_be = jnp.concatenate([x, jnp.tanh(((x * R) @ weight.T) * S)], axis=1)
    assert out_be.shape == (B, Cin + Cout)
    assert jnp.allclose(out_be, ref_be, atol=1e-3, rtol=1e-3), "BE path mismatch"

    # --- plain Linear(+bias) + tanh + concat (be_size=None branch) ---
    out_plain = jax.block_until_ready(
        linear_block_forward(x, weight, bias=bias, be_size=None,
                             activation='tanh', skip_connection='concat'))
    ref_plain = jnp.concatenate([x, jnp.tanh(x @ weight.T + bias)], axis=1)
    assert out_plain.shape == (B, Cin + Cout)
    assert jnp.allclose(out_plain, ref_plain, atol=1e-3, rtol=1e-3), "plain path mismatch"

    # --- larger batch exercising the resident-table BE fast path ---
    B2, be2 = 512, 4
    x2 = jax.random.normal(kx2, (B2, Cin), dtype=jnp.float32)
    ri2 = jax.random.normal(kr2, (be2, Cin), dtype=jnp.float32)
    si2 = jax.random.normal(ks2, (be2, Cout), dtype=jnp.float32)
    out2 = jax.block_until_ready(
        linear_block_forward(x2, weight, ri=ri2, si=si2, be_size=be2,
                             activation='tanh', skip_connection='concat'))
    R2 = jnp.repeat(ri2, B2 // be2, axis=0)
    S2 = jnp.repeat(si2, B2 // be2, axis=0)
    ref2 = jnp.concatenate([x2, jnp.tanh(((x2 * R2) @ weight.T) * S2)], axis=1)
    assert out2.shape == (B2, Cin + Cout)
    assert jnp.allclose(out2, ref2, atol=1e-3, rtol=1e-3), "BE fast-path mismatch"

    print("KERNEL_OK")
</pallas_src>

<mosaic_0001>
module attributes {stable_mosaic.version = 11 : i64} {
  func.func @_be_kernel(%arg0: i32, %arg1: memref<16x32xf32, #tpu.memory_space<vmem>>, %arg2: memref<16x32xf32, #tpu.memory_space<vmem>>, %arg3: memref<32x32xf32, #tpu.memory_space<vmem>>, %arg4: memref<16x32xf32, #tpu.memory_space<vmem>>, %arg5: memref<16x64xf32, #tpu.memory_space<vmem>>) attributes {dimension_semantics = [#tpu.dimension_semantics<parallel>], iteration_bounds = array<i64: 1>, scalar_prefetch = 0 : i64, scratch_operands = 0 : i64, tpu.core_type = #tpu.core_type<tc>, window_params = [{transform_indices = @transform_0, window_bounds = array<i64: 16, 32>}, {transform_indices = @transform_1, window_bounds = array<i64: 16, 32>}, {pipeline_mode = #tpu.pipeline_mode<synchronous>, transform_indices = @transform_2, window_bounds = array<i64: 32, 32>}, {transform_indices = @transform_3, window_bounds = array<i64: 16, 32>}, {transform_indices = @transform_4, window_bounds = array<i64: 16, 64>}]} {
    %c0 = arith.constant 0 : index
    %c0_0 = arith.constant 0 : index
    %0 = vector.load %arg1[%c0, %c0_0] : memref<16x32xf32, #tpu.memory_space<vmem>>, vector<16x32xf32>
    %c0_1 = arith.constant 0 : index
    %c0_2 = arith.constant 0 : index
    %1 = vector.load %arg2[%c0_1, %c0_2] : memref<16x32xf32, #tpu.memory_space<vmem>>, vector<16x32xf32>
    %c0_3 = arith.constant 0 : index
    %c0_4 = arith.constant 0 : index
    %2 = vector.load %arg4[%c0_3, %c0_4] : memref<16x32xf32, #tpu.memory_space<vmem>>, vector<16x32xf32>
    %3 = arith.mulf %0, %1 : vector<16x32xf32>
    %c0_5 = arith.constant 0 : index
    %c0_6 = arith.constant 0 : index
    %4 = vector.load %arg3[%c0_5, %c0_6] : memref<32x32xf32, #tpu.memory_space<vmem>>, vector<32x32xf32>
    %cst = arith.constant dense<0.000000e+00> : vector<16x32xf32>
    %5 = tpu.matmul %3, %4, %cst {dimension_numbers = #tpu.dot_dimension_numbers<[1], [0], [0], [1], [0, 0, 1, 1], [], []>} : vector<16x32xf32>, vector<32x32xf32>, vector<16x32xf32> -> vector<16x32xf32>
    %6 = arith.mulf %5, %2 : vector<16x32xf32>
    %7 = math.tanh %6 : vector<16x32xf32>
    %8 = tpu.concatenate %0, %7 in 1 : vector<16x32xf32>, vector<16x32xf32> -> vector<16x64xf32>
    %c0_7 = arith.constant 0 : index
    %c0_8 = arith.constant 0 : index
    %9 = vector.load %arg5[%c0_7, %c0_8] : memref<16x64xf32, #tpu.memory_space<vmem>>, vector<16x64xf32>
    tpu.vector_store %arg5[%c0_7, %c0_8], %8 {strides = array<i32>} : memref<16x64xf32, #tpu.memory_space<vmem>>, vector<16x64xf32>,
    return
  }
  func.func @transform_0(%arg0: i32) -> (i32, i32) {
    %c0_i32 = arith.constant 0 : i32
    %c0_i32_0 = arith.constant 0 : i32
    return %arg0, %c0_i32 : i32, i32
  }
  func.func @transform_1(%arg0: i32) -> (i32, i32) {
    %c0_i32 = arith.constant 0 : i32
    %c0_i32_0 = arith.constant 0 : i32
    return %arg0, %c0_i32 : i32, i32
  }
  func.func @transform_2(%arg0: i32) -> (i32, i32) {
    %c0_i32 = arith.constant 0 : i32
    %c0_i32_0 = arith.constant 0 : i32
    %c0_i32_1 = arith.constant 0 : i32
    return %c0_i32, %c0_i32_0 : i32, i32
  }
  func.func @transform_3(%arg0: i32) -> (i32, i32) {
    %c0_i32 = arith.constant 0 : i32
    %c0_i32_0 = arith.constant 0 : i32
    return %arg0, %c0_i32 : i32, i32
  }
  func.func @transform_4(%arg0: i32) -> (i32, i32) {
    %c0_i32 = arith.constant 0 : i32
    %c0_i32_0 = arith.constant 0 : i32
    return %arg0, %c0_i32 : i32, i32
  }
}

</mosaic_0001>

<llo_original>
// kernel: tpu_custom_call.1
$region0: #{tpu_custom_call.1}
  #allocation0 [shape = 'u32[]', space=smem, size = 0x4, offset = 0x4, fixed_abs, tag = 'smem constant byte address 0x4 - core index']
  #allocation1 [shape = 'u32[144,128]{1,0:T(1,128)}', space=vmem, size = 0x12000, scoped, tag = 'internal scratch']
  %s0 = inlined_call_operand.hbm [shape: f32[16,32], index: 0, kind: input, shape index: {}]
  %s1 = inlined_call_operand.hbm [shape: f32[16,32], index: 1, kind: input, shape index: {}]
  %s2 = inlined_call_operand.hbm [shape: f32[32,32], index: 2, kind: input, shape index: {}]
  %s3 = inlined_call_operand.hbm [shape: f32[16,32], index: 3, kind: input, shape index: {}]
  %s4 = inlined_call_operand.hbm [shape: f32[16,64], index: 4, kind: output, shape index: {}]
  %s5 = sld [smem:[#allocation0]]
  $region42: #{tpu_custom_call.1} parent=0
    _
  %s7 = ssub.s32 1, %s5
  %s8 = scalar_select 0, %s7, %s5
  $region1: #{tpu_custom_call.1} parent=0
    #allocation2 [shape = 'u8[8192]{0}', space=vmem, size = 0x2000, scoped, tag = 'input window, operand 0, single buffered']
    #allocation3 [shape = 's32[1]{0}', space=sflag, size = 0x4, scoped, tag = 'scoped memory for tpu_custom_call.1']
    #allocation4 [shape = 's32[1]{0}', space=sflag, size = 0x4, scoped, tag = 'scoped memory for tpu_custom_call.1']
    #allocation5 [shape = 'u8[8192]{0}', space=vmem, size = 0x2000, scoped, tag = 'input window, operand 1, single buffered']
    #allocation6 [shape = 's32[1]{0}', space=sflag, size = 0x4, scoped, tag = 'scoped memory for tpu_custom_call.1']
    #allocation7 [shape = 'u8[16384]{0}', space=vmem, size = 0x4000, scoped, tag = 'input window, operand 2, single buffered']
    #allocation8 [shape = 'u8[8192]{0}', space=vmem, size = 0x2000, scoped, tag = 'input window, operand 3, single buffered']
    #allocation9 [shape = 's32[1]{0}', space=sflag, size = 0x4, scoped, tag = 'scoped memory for tpu_custom_call.1']
    #allocation10 [shape = 'u8[8192]{0}', space=vmem, size = 0x2000, scoped, tag = 'output window, operand 0, single buffered']
    %9 = vsyncpa [#allocation3], 0
    %10 = vsyncpa [#allocation6], 0
    %11 = vsyncpa [#allocation9], 0
    %12 = vsyncpa [#allocation4], 0
    // Predicated region
    $region2: #{tpu_custom_call.1} parent=1 // pred_check
      _
    $region3: #{tpu_custom_call.1} parent=1 // pred_check_branch
      %14 = sbr.rel (0) target = $region5
    $region4: #{tpu_custom_call.1} parent=1 // pred_region
      %s16 = ssub.s32 256, 256
      %17 = vsyncadd [#allocation3], %s16
      %s18 = sshll.u32 [#allocation2], 4
      %s19 = int_to_ptr.vmem [resolvable:$true] %s18
      %24 = dma.hbm_to_vmem [thread:$0]  %s0, 256, %s19, [#allocation3], 128, 128, 8
    $region5: #{tpu_custom_call.1} parent=1 // pred_fallthru
      _
    // Predicated region
    $region6: #{tpu_custom_call.1} parent=1 // pred_check
      _
    $region7: #{tpu_custom_call.1} parent=1 // pred_check_branch
      %26 = sbr.rel (0) target = $region9
    $region8: #{tpu_custom_call.1} parent=1 // pred_region
      %s28 = ssub.s32 256, 256
      %29 = vsyncadd [#allocation6], %s28
      %s30 = sshll.u32 [#allocation5], 4
      %s31 = int_to_ptr.vmem [resolvable:$true] %s30
      %36 = dma.hbm_to_vmem [thread:$0]  %s1, 256, %s31, [#allocation6], 128, 128, 8
    $region9: #{tpu_custom_call.1} parent=1 // pred_fallthru
      _
    // Predicated region
    $region10: #{tpu_custom_call.1} parent=1 // pred_check
      _
    $region11: #{tpu_custom_call.1} parent=1 // pred_check_branch
      %38 = sbr.rel (0) target = $region13
    $region12: #{tpu_custom_call.1} parent=1 // pred_region
      %s40 = ssub.s32 512, 512
      %41 = vsyncadd [#allocation6], %s40
      %s42 = sshll.u32 [#allocation7], 4
      %s43 = int_to_ptr.vmem [resolvable:$true] %s42
      %48 = dma.hbm_to_vmem [thread:$0]  %s2, 512, %s43, [#allocation6], 128, 128, 8
    $region13: #{tpu_custom_call.1} parent=1 // pred_fallthru
      _
    // Predicated region
    $region14: #{tpu_custom_call.1} parent=1 // pred_check
      _
    $region15: #{tpu_custom_call.1} parent=1 // pred_check_branch
      %50 = sbr.rel (0) target = $region17
    $region16: #{tpu_custom_call.1} parent=1 // pred_region
      %s52 = ssub.s32 256, 256
      %53 = vsyncadd [#allocation9], %s52
      %s54 = sshll.u32 [#allocation8], 4
      %s55 = int_to_ptr.vmem [resolvable:$true] %s54
      %60 = dma.hbm_to_vmem [thread:$0]  %s3, 256, %s55, [#allocation9], 128, 128, 8
    $region17: #{tpu_custom_call.1} parent=1 // pred_fallthru
      _
    // Predicated region
    $region18: #{tpu_custom_call.1} parent=1 // pred_check
      _
    $region19: #{tpu_custom_call.1} parent=1 // pred_check_branch
      %62 = sbr.rel (0) target = $region21
    $region20: #{tpu_custom_call.1} parent=1 // pred_region
      %63 = dma.done [#allocation3], 256
    $region21: #{tpu_custom_call.1} parent=1 // pred_fallthru
      _
    // Predicated region
    $region22: #{tpu_custom_call.1} parent=1 // pred_check
      _
    $region23: #{tpu_custom_call.1} parent=1 // pred_check_branch
      %65 = sbr.rel (0) target = $region25
    $region24: #{tpu_custom_call.1} parent=1 // pred_region
      %66 = dma.done [#allocation6], 256
    $region25: #{tpu_custom_call.1} parent=1 // pred_fallthru
      _
    // Predicated region
    $region26: #{tpu_custom_call.1} parent=1 // pred_check
      _
    $region27: #{tpu_custom_call.1} parent=1 // pred_check_branch
      %68 = sbr.rel (0) target = $region29
    $region28: #{tpu_custom_call.1} parent=1 // pred_region
      %69 = dma.done [#allocation6], 512
    $region29: #{tpu_custom_call.1} parent=1 // pred_fallthru
      _
    // Predicated region
    $region30: #{tpu_custom_call.1} parent=1 // pred_check
      _
    $region31: #{tpu_custom_call.1} parent=1 // pred_check_branch
      %71 = sbr.rel (0) target = $region33
    $region32: #{tpu_custom_call.1} parent=1 // pred_region
      %72 = dma.done [#allocation9], 256
    $region33: #{tpu_custom_call.1} parent=1 // pred_fallthru
      _
    %v73 = vld [vmem:[#allocation2] sm:$0xff]
    %v74 = vld [vmem:[#allocation2 + $0x8] sm:$0xff]
    %v75 = vld [vmem:[#allocation5] sm:$0xff]
    %v76 = vld [vmem:[#allocation5 + $0x8] sm:$0xff]
    %v77 = vld [vmem:[#allocation8] sm:$0xff]
    %v78 = vld [vmem:[#allocation8 + $0x8] sm:$0xff]
    %v79 = vmul.f32 %v73, %v75
    %v80 = vmul.f32 %v74, %v76
    %v81 = vld [vmem:[#allocation7] sm:$0xff]
    %v82 = vld [vmem:[#allocation7 + $0x8] sm:$0xff]
    %v83 = vld [vmem:[#allocation7 + $0x10] sm:$0xff]
    %v84 = vld [vmem:[#allocation7 + $0x18] sm:$0xff]
    %vm85 = vcmask 261120
    %v87 = vsel %vm85, %v79, 0
    %v90 = vsel %vm85, %v80, 0
    %92 = vmatprep.subr.mxu0 0.0
    %93 = vmatpush1.msra.mxu0 %v81
    %94 = vmatprep.subr.mxu0 0.0
    %95 = vmatpush1.msra.mxu0 %v82
    %96 = vmatprep.subr.mxu0 0.0
    %97 = vmatpush1.msra.mxu0 %v83
    %98 = vmatprep.subr.mxu0 0.0
    %99 = vmatpush1.msra.mxu0 %v84
    %100 = vmatprep.subr.mxu0 0.0
    %101 = vmatpush1.msra.mxu0 0.0
    %102 = vmatprep.subr.mxu0 0.0
    %103 = vmatpush1.msra.mxu0 0.0
    %104 = vmatprep.subr.mxu0 0.0
    %105 = vmatpush1.msra.mxu0 0.0
    %106 = vmatprep.subr.mxu0 0.0
    %107 = vmatpush1.msra.mxu0 0.0
    %108 = vmatprep.subr.mxu0 0.0
    %109 = vmatpush1.msra.mxu0 0.0
    %110 = vmatprep.subr.mxu0 0.0
    %111 = vmatpush1.msra.mxu0 0.0
    %112 = vmatprep.subr.mxu0 0.0
    %113 = vmatpush1.msra.mxu0 0.0
    %114 = vmatprep.subr.mxu0 0.0
    %115 = vmatpush1.msra.mxu0 0.0
    %116 = vmatprep.subr.mxu0 0.0
    %117 = vmatpush1.msra.mxu0 0.0
    %118 = vmatprep.subr.mxu0 0.0
    %119 = vmatpush1.msra.mxu0 0.0
    %120 = vmatprep.subr.mxu0 0.0
    %121 = vmatpush1.msra.mxu0 0.0
    %122 = vmatprep.subr.mxu0 0.0
    %123 = vmatpush1.msra.mxu0 0.0
    %124 = vmatprep.subr.mxu0 0.0
    %125 = vmatpush1.msra.mxu0 0.0
    %126 = vmatprep.subr.mxu0 0.0
    %127 = vmatpush1.msra.mxu0 0.0
    %128 = vmatprep.subr.mxu0 0.0
    %129 = vmatpush1.msra.mxu0 0.0
    %130 = vmatprep.subr.mxu0 0.0
    %131 = vmatpush1.msra.mxu0 0.0
    %132 = vmatprep.subr.mxu0 0.0
    %133 = vmatpush1.msra.mxu0 0.0
    %134 = vmatprep.subr.mxu0 0.0
    %135 = vmatpush1.msra.mxu0 0.0
    %136 = vmatprep.subr.mxu0 0.0
    %137 = vmatpush1.msra.mxu0 0.0
    %138 = vmatprep.subr.mxu0 0.0
    %139 = vmatpush1.msra.mxu0 0.0
    %140 = vmatprep.subr.mxu0 0.0
    %141 = vmatpush1.msra.mxu0 0.0
    %142 = vmatprep.subr.mxu0 0.0
    %143 = vmatpush1.msra.mxu0 0.0
    %144 = vmatprep.subr.mxu0 0.0
    %145 = vmatpush1.msra.mxu0 0.0
    %146 = vmatprep.subr.mxu0 0.0
    %147 = vmatpush1.msra.mxu0 0.0
    %148 = vmatprep.subr.mxu0 0.0
    %149 = vmatpush1.msra.mxu0 0.0
    %150 = vmatprep.subr.mxu0 0.0
    %151 = vmatpush1.msra.mxu0 0.0
    %152 = vmatprep.subr.mxu0 0.0
    %153 = vmatpush1.msra.mxu0 0.0
    %154 = vmatprep.subr.mxu0 0.0
    %155 = vmatpush1.msra.mxu0 0.0
    %156 = vmatprep.mubr.f32.mxu0 0.0
    %157 = vmatmul.mubr.f32.gmra.mrb[0].mxu0 %v87
    %v158 = vpop.f32.mrb[0].mxu0
    %v159 = vadd.f32 0.0, %v158
    %v160 = vpop.f32.mrb[0].mxu0
    %161 = vmatprep.mubr.f32.mxu0 0.0
    %162 = vmatmul.mubr.f32.gmra.mrb[0].mxu0 %v90
    %v163 = vpop.f32.mrb[0].mxu0
    %v164 = vadd.f32 0.0, %v163
    %v165 = vpop.f32.mrb[0].mxu0
    %166 = vdwg.mxu0
    %v167 = vmul.f32 %v159, %v77
    %v168 = vmul.f32 %v164, %v78
    %v169 = vtanh.pop %v167
    %v170 = vtanh.pop %v168
    %173 = vrot.lane.b32.xlu0 %v169, 32
    %v174 = vpop.permute.xlu0 %173
    %175 = vrot.lane.b32.xlu0 %v170, 32
    %v176 = vpop.permute.xlu0 %175
    %v179 = vsel %vm85, %v73, %v174
    %v180 = vsel %vm85, %v74, %v176
    %vm181 = vcmask 523264
    %182 = vst.msk [vmem:[#allocation10] sm:$0xff] %vm181, %v179
    %183 = vst.msk [vmem:[#allocation10 + $0x8] sm:$0xff] %vm181, %v180
    // Predicated region
    $region34: #{tpu_custom_call.1} parent=1 // pred_check
      _
    $region35: #{tpu_custom_call.1} parent=1 // pred_check_branch
      %185 = sbr.rel (0) target = $region37
    $region36: #{tpu_custom_call.1} parent=1 // pred_region
      %s187 = ssub.s32 256, 256
      %188 = vsyncadd [#allocation4], %s187
      %s189 = sshll.u32 [#allocation10], 4
      %s190 = int_to_ptr.vmem [resolvable:$true] %s189
      %195 = dma.vmem_to_hbm [thread:$0]  %s190, 256, %s4, [#allocation4], 128, 128, 8
    $region37: #{tpu_custom_call.1} parent=1 // pred_fallthru
      _
    // Predicated region
    $region38: #{tpu_custom_call.1} parent=1 // pred_check
      _
    $region39: #{tpu_custom_call.1} parent=1 // pred_check_branch
      %197 = sbr.rel (0) target = $region41
    $region40: #{tpu_custom_call.1} parent=1 // pred_region
      %198 = dma.done [#allocation4], 256
    $region41: #{tpu_custom_call.1} parent=1 // pred_fallthru
      _
    %199 = vsyncpa [#allocation3], 1
    %200 = vsyncpa [#allocation6], 1
    %201 = vsyncpa [#allocation9], 1
    %202 = vsyncpa [#allocation4], 1

</llo_original>
